<compile_context>
chip_gen: v7x
topology: tpu7x:2x2x1
jax: 0.10.0
libtpu: 0.0.40
codegen_flags: <defaults>
</compile_context>

<pallas_src>
import jax
import jax.numpy as jnp
from jax.experimental import pallas as pl
from jax.experimental.pallas import tpu as pltpu


def _round_up(x, m):
    return (x + m - 1) // m * m


# ----------------------------- Pallas kernel --------------------------------
def _fused_linear_q_kernel(w_ref, zt_ref, o_ref):
    """q = feature_fn(z)^T w computed directly from the raw inputs.

    w_ref : (F,)     f32 in SMEM   (F = 1 + Z + Z*(Z+1)//2)
    zt_ref: (Z, TM)  f32 in VMEM   (batch on the lane axis)
    o_ref : (1, TM)  f32 in VMEM   (lane-dense output row)

    Feature order matches feature_fn(): [1, z_0..z_{Z-1}, z_i*z_j (i<=j,
    row-major upper triangle)].
    """
    Z = zt_ref.shape[0]
    zt = zt_ref[...]                                       # (Z, TM)

    # constant term
    acc = jnp.full(o_ref.shape, w_ref[0], dtype=jnp.float32)

    # linear terms: w[1+i] * z_i   (scalar x lane-dense row, VPU)
    k = 1
    for i in range(Z):
        acc = acc + w_ref[k] * zt[i:i + 1, :]
        k += 1

    # quadratic terms: w[k] * z_i * z_j, i <= j
    for i in range(Z):
        zi = zt[i:i + 1, :]
        for j in range(i, Z):
            acc = acc + w_ref[k] * (zi * zt[j:j + 1, :])
            k += 1

    o_ref[...] = acc.astype(o_ref.dtype)


def linear_q_pallas(state, action, w_row, *, tm=512):
    """Fused  q = feature_fn([state, action]) @ w_row.T  ->  (B, 1).

    state : (B, S) f32,  action: (B, A) f32
    w_row : (1, F) f32   (torch Linear weight layout)
    """
    z = jnp.concatenate([state, action], axis=-1)          # (B, Z)
    B, Z = z.shape
    F = w_row.shape[-1]
    assert F == 1 + Z + Z * (Z + 1) // 2, "weight size mismatch with basis"

    # Batch tile: multiple of 128 lanes; <=512 rows keeps double-buffered
    # tiles tiny while amortizing the ~0.35us per-grid-step overhead.
    tm_eff = min(tm, _round_up(B, 128))
    b_pad = _round_up(B, tm_eff)
    grid = (b_pad // tm_eff,)

    # Lane-dense transposed layout: batch on lanes, features on sublanes.
    zt = jnp.pad(z.T, ((0, 0), (0, b_pad - B)))            # (Z, b_pad)
    w_flat = w_row.reshape(F).astype(jnp.float32)          # (F,) -> SMEM

    cost = pl.CostEstimate(
        flops=2 * b_pad * F,
        transcendentals=0,
        bytes_accessed=(Z * b_pad + b_pad + F) * 4,
    )

    q_row = pl.pallas_call(
        _fused_linear_q_kernel,
        out_shape=jax.ShapeDtypeStruct((1, b_pad), jnp.float32),
        grid=grid,
        in_specs=[
            # Tiny weight vector: whole array resident in SMEM (scalar reads).
            pl.BlockSpec(memory_space=pltpu.MemorySpace.SMEM),
            # (Z, TM) tile: Z equals the full sublane extent, TM lane-aligned.
            pl.BlockSpec((Z, tm_eff), lambda i: (0, i)),
        ],
        # Lane-dense (1, TM) output tile -> unmasked vector stores.
        out_specs=pl.BlockSpec((1, tm_eff), lambda i: (0, i)),
        compiler_params=pltpu.CompilerParams(
            dimension_semantics=("parallel",),  # shards across TCs on v7x
        ),
        cost_estimate=cost,
    )(w_flat, zt)

    return q_row[0, :B].reshape(B, 1).astype(state.dtype)


# ----------------------------- feature_fn glue -------------------------------
def feature_fn(state, action):
    """Quadratic polynomial features over z = [state, action] (pure-JAX ref)."""
    z = jnp.concatenate([state, action], axis=-1)          # (B, Z)
    B, Z = z.shape
    ones = jnp.ones((B, 1), dtype=z.dtype)
    iu, ju = jnp.triu_indices(Z)
    quad = z[:, iu] * z[:, ju]                             # (B, Z*(Z+1)//2)
    return jnp.concatenate([ones, z, quad], axis=-1)


# ----------------------------- module wrapper --------------------------------
class LinearQFunctionPallas:
    """Pallas port of LinearQFunction (Linear(n_features, 1, bias=False))."""

    # TODO(synk): an arbitrary user-supplied feature_fn cannot be fused
    # generically; this port fuses the quadratic polynomial basis above.
    def __init__(self, n_features, feature_fn, key):
        # torch.nn.Linear(n_features, 1, bias=False) default init:
        # U(-1/sqrt(fan_in), 1/sqrt(fan_in)); weight shape (1, n_features).
        bound = 1.0 / (n_features ** 0.5)
        self.w = jax.random.uniform(
            key, (1, n_features), dtype=jnp.float32, minval=-bound, maxval=bound
        )
        self.feature_fn = feature_fn  # kept for the pure-JAX reference path

    def __call__(self, state, action):
        return linear_q_pallas(state, action, self.w)


# --------------------------------- demo --------------------------------------
if __name__ == "__main__":
    key = jax.random.PRNGKey(0)
    k_state, k_action, k_w = jax.random.split(key, 3)

    B, S, A = 8, 3, 1                        # batch, state dim, action dim
    state = jax.random.normal(k_state, (B, S), dtype=jnp.float32)
    action = jax.random.normal(k_action, (B, A), dtype=jnp.float32)

    Z = S + A
    n_features = 1 + Z + Z * (Z + 1) // 2    # 15

    qf = LinearQFunctionPallas(n_features, feature_fn, k_w)

    # small demo batch
    q = jax.block_until_ready(qf(state, action))
    q_ref = feature_fn(state, action) @ qf.w.T
    assert q.shape == (B, 1)
    assert jnp.allclose(q, q_ref, atol=1e-4, rtol=1e-4)

    # larger batch to exercise the tiled grid (2 tiles of 512 rows, tail pad)
    B2 = 1000
    s2 = jax.random.normal(k_state, (B2, S), dtype=jnp.float32)
    a2 = jax.random.normal(k_action, (B2, A), dtype=jnp.float32)
    q2 = jax.block_until_ready(qf(s2, a2))
    q2_ref = feature_fn(s2, a2) @ qf.w.T
    assert q2.shape == (B2, 1)
    assert jnp.allclose(q2, q2_ref, atol=1e-4, rtol=1e-4)

    print("KERNEL_OK")
</pallas_src>

<mosaic_0001>
module attributes {stable_mosaic.version = 11 : i64} {
  func.func @_fused_linear_q_kernel(%arg0: i32, %arg1: memref<15xf32, #tpu.memory_space<smem>>, %arg2: memref<4x128xf32, #tpu.memory_space<vmem>>, %arg3: memref<1x128xf32, #tpu.memory_space<vmem>>) attributes {dimension_semantics = [#tpu.dimension_semantics<parallel>], iteration_bounds = array<i64: 1>, scalar_prefetch = 0 : i64, scratch_operands = 0 : i64, tpu.core_type = #tpu.core_type<tc>, window_params = [{transform_indices = @transform_0, window_bounds = array<i64: 15>}, {transform_indices = @transform_1, window_bounds = array<i64: 4, 128>}, {transform_indices = @transform_2, window_bounds = array<i64: 1, 128>}]} {
    %c0 = arith.constant 0 : index
    %c0_0 = arith.constant 0 : index
    %0 = vector.load %arg2[%c0, %c0_0] : memref<4x128xf32, #tpu.memory_space<vmem>>, vector<4x128xf32>
    %c0_1 = arith.constant 0 : index
    %1 = memref.load %arg1[%c0_1] : memref<15xf32, #tpu.memory_space<smem>>
    %2 = vector.broadcast %1 : f32 to vector<1x128xf32>
    %c1 = arith.constant 1 : index
    %3 = memref.load %arg1[%c1] : memref<15xf32, #tpu.memory_space<smem>>
    %4 = vector.extract_strided_slice %0 {offsets = [0, 0], sizes = [1, 128], strides = [1, 1]} : vector<4x128xf32> to vector<1x128xf32>
    %5 = vector.broadcast %3 : f32 to vector<1x128xf32>
    %6 = arith.mulf %5, %4 : vector<1x128xf32>
    %7 = arith.addf %2, %6 : vector<1x128xf32>
    %c2 = arith.constant 2 : index
    %8 = memref.load %arg1[%c2] : memref<15xf32, #tpu.memory_space<smem>>
    %9 = vector.extract_strided_slice %0 {offsets = [1, 0], sizes = [1, 128], strides = [1, 1]} : vector<4x128xf32> to vector<1x128xf32>
    %10 = vector.broadcast %8 : f32 to vector<1x128xf32>
    %11 = arith.mulf %10, %9 : vector<1x128xf32>
    %12 = arith.addf %7, %11 : vector<1x128xf32>
    %c3 = arith.constant 3 : index
    %13 = memref.load %arg1[%c3] : memref<15xf32, #tpu.memory_space<smem>>
    %14 = vector.extract_strided_slice %0 {offsets = [2, 0], sizes = [1, 128], strides = [1, 1]} : vector<4x128xf32> to vector<1x128xf32>
    %15 = vector.broadcast %13 : f32 to vector<1x128xf32>
    %16 = arith.mulf %15, %14 : vector<1x128xf32>
    %17 = arith.addf %12, %16 : vector<1x128xf32>
    %c4 = arith.constant 4 : index
    %18 = memref.load %arg1[%c4] : memref<15xf32, #tpu.memory_space<smem>>
    %19 = vector.extract_strided_slice %0 {offsets = [3, 0], sizes = [1, 128], strides = [1, 1]} : vector<4x128xf32> to vector<1x128xf32>
    %20 = vector.broadcast %18 : f32 to vector<1x128xf32>
    %21 = arith.mulf %20, %19 : vector<1x128xf32>
    %22 = arith.addf %17, %21 : vector<1x128xf32>
    %23 = vector.extract_strided_slice %0 {offsets = [0, 0], sizes = [1, 128], strides = [1, 1]} : vector<4x128xf32> to vector<1x128xf32>
    %c5 = arith.constant 5 : index
    %24 = memref.load %arg1[%c5] : memref<15xf32, #tpu.memory_space<smem>>
    %25 = vector.extract_strided_slice %0 {offsets = [0, 0], sizes = [1, 128], strides = [1, 1]} : vector<4x128xf32> to vector<1x128xf32>
    %26 = arith.mulf %23, %25 : vector<1x128xf32>
    %27 = vector.broadcast %24 : f32 to vector<1x128xf32>
    %28 = arith.mulf %27, %26 : vector<1x128xf32>
    %29 = arith.addf %22, %28 : vector<1x128xf32>
    %c6 = arith.constant 6 : index
    %30 = memref.load %arg1[%c6] : memref<15xf32, #tpu.memory_space<smem>>
    %31 = vector.extract_strided_slice %0 {offsets = [1, 0], sizes = [1, 128], strides = [1, 1]} : vector<4x128xf32> to vector<1x128xf32>
    %32 = arith.mulf %23, %31 : vector<1x128xf32>
    %33 = vector.broadcast %30 : f32 to vector<1x128xf32>
    %34 = arith.mulf %33, %32 : vector<1x128xf32>
    %35 = arith.addf %29, %34 : vector<1x128xf32>
    %c7 = arith.constant 7 : index
    %36 = memref.load %arg1[%c7] : memref<15xf32, #tpu.memory_space<smem>>
    %37 = vector.extract_strided_slice %0 {offsets = [2, 0], sizes = [1, 128], strides = [1, 1]} : vector<4x128xf32> to vector<1x128xf32>
    %38 = arith.mulf %23, %37 : vector<1x128xf32>
    %39 = vector.broadcast %36 : f32 to vector<1x128xf32>
    %40 = arith.mulf %39, %38 : vector<1x128xf32>
    %41 = arith.addf %35, %40 : vector<1x128xf32>
    %c8 = arith.constant 8 : index
    %42 = memref.load %arg1[%c8] : memref<15xf32, #tpu.memory_space<smem>>
    %43 = vector.extract_strided_slice %0 {offsets = [3, 0], sizes = [1, 128], strides = [1, 1]} : vector<4x128xf32> to vector<1x128xf32>
    %44 = arith.mulf %23, %43 : vector<1x128xf32>
    %45 = vector.broadcast %42 : f32 to vector<1x128xf32>
    %46 = arith.mulf %45, %44 : vector<1x128xf32>
    %47 = arith.addf %41, %46 : vector<1x128xf32>
    %48 = vector.extract_strided_slice %0 {offsets = [1, 0], sizes = [1, 128], strides = [1, 1]} : vector<4x128xf32> to vector<1x128xf32>
    %c9 = arith.constant 9 : index
    %49 = memref.load %arg1[%c9] : memref<15xf32, #tpu.memory_space<smem>>
    %50 = vector.extract_strided_slice %0 {offsets = [1, 0], sizes = [1, 128], strides = [1, 1]} : vector<4x128xf32> to vector<1x128xf32>
    %51 = arith.mulf %48, %50 : vector<1x128xf32>
    %52 = vector.broadcast %49 : f32 to vector<1x128xf32>
    %53 = arith.mulf %52, %51 : vector<1x128xf32>
    %54 = arith.addf %47, %53 : vector<1x128xf32>
    %c10 = arith.constant 10 : index
    %55 = memref.load %arg1[%c10] : memref<15xf32, #tpu.memory_space<smem>>
    %56 = vector.extract_strided_slice %0 {offsets = [2, 0], sizes = [1, 128], strides = [1, 1]} : vector<4x128xf32> to vector<1x128xf32>
    %57 = arith.mulf %48, %56 : vector<1x128xf32>
    %58 = vector.broadcast %55 : f32 to vector<1x128xf32>
    %59 = arith.mulf %58, %57 : vector<1x128xf32>
    %60 = arith.addf %54, %59 : vector<1x128xf32>
    %c11 = arith.constant 11 : index
    %61 = memref.load %arg1[%c11] : memref<15xf32, #tpu.memory_space<smem>>
    %62 = vector.extract_strided_slice %0 {offsets = [3, 0], sizes = [1, 128], strides = [1, 1]} : vector<4x128xf32> to vector<1x128xf32>
    %63 = arith.mulf %48, %62 : vector<1x128xf32>
    %64 = vector.broadcast %61 : f32 to vector<1x128xf32>
    %65 = arith.mulf %64, %63 : vector<1x128xf32>
    %66 = arith.addf %60, %65 : vector<1x128xf32>
    %67 = vector.extract_strided_slice %0 {offsets = [2, 0], sizes = [1, 128], strides = [1, 1]} : vector<4x128xf32> to vector<1x128xf32>
    %c12 = arith.constant 12 : index
    %68 = memref.load %arg1[%c12] : memref<15xf32, #tpu.memory_space<smem>>
    %69 = vector.extract_strided_slice %0 {offsets = [2, 0], sizes = [1, 128], strides = [1, 1]} : vector<4x128xf32> to vector<1x128xf32>
    %70 = arith.mulf %67, %69 : vector<1x128xf32>
    %71 = vector.broadcast %68 : f32 to vector<1x128xf32>
    %72 = arith.mulf %71, %70 : vector<1x128xf32>
    %73 = arith.addf %66, %72 : vector<1x128xf32>
    %c13 = arith.constant 13 : index
    %74 = memref.load %arg1[%c13] : memref<15xf32, #tpu.memory_space<smem>>
    %75 = vector.extract_strided_slice %0 {offsets = [3, 0], sizes = [1, 128], strides = [1, 1]} : vector<4x128xf32> to vector<1x128xf32>
    %76 = arith.mulf %67, %75 : vector<1x128xf32>
    %77 = vector.broadcast %74 : f32 to vector<1x128xf32>
    %78 = arith.mulf %77, %76 : vector<1x128xf32>
    %79 = arith.addf %73, %78 : vector<1x128xf32>
    %80 = vector.extract_strided_slice %0 {offsets = [3, 0], sizes = [1, 128], strides = [1, 1]} : vector<4x128xf32> to vector<1x128xf32>
    %c14 = arith.constant 14 : index
    %81 = memref.load %arg1[%c14] : memref<15xf32, #tpu.memory_space<smem>>
    %82 = vector.extract_strided_slice %0 {offsets = [3, 0], sizes = [1, 128], strides = [1, 1]} : vector<4x128xf32> to vector<1x128xf32>
    %83 = arith.mulf %80, %82 : vector<1x128xf32>
    %84 = vector.broadcast %81 : f32 to vector<1x128xf32>
    %85 = arith.mulf %84, %83 : vector<1x128xf32>
    %86 = arith.addf %79, %85 : vector<1x128xf32>
    %c0_2 = arith.constant 0 : index
    %c0_3 = arith.constant 0 : index
    %87 = vector.load %arg3[%c0_2, %c0_3] : memref<1x128xf32, #tpu.memory_space<vmem>>, vector<1x128xf32>
    tpu.vector_store %arg3[%c0_2, %c0_3], %86 {strides = array<i32>} : memref<1x128xf32, #tpu.memory_space<vmem>>, vector<1x128xf32>,
    return
  }
  func.func @transform_0(%arg0: i32) -> i32 {
    %c0_i32 = arith.constant 0 : i32
    %c0_i32_0 = arith.constant 0 : i32
    return %c0_i32 : i32
  }
  func.func @transform_1(%arg0: i32) -> (i32, i32) {
    %c0_i32 = arith.constant 0 : i32
    %c0_i32_0 = arith.constant 0 : i32
    return %c0_i32, %arg0 : i32, i32
  }
  func.func @transform_2(%arg0: i32) -> (i32, i32) {
    %c0_i32 = arith.constant 0 : i32
    %c0_i32_0 = arith.constant 0 : i32
    return %c0_i32, %arg0 : i32, i32
  }
}

</mosaic_0001>

<llo_original>
// kernel: tpu_custom_call.1
$region0: #{tpu_custom_call.1}
  #allocation0 [shape = 'u32[]', space=smem, size = 0x4, offset = 0x4, fixed_abs, tag = 'smem constant byte address 0x4 - core index']
  #allocation1 [shape = 'u32[144,128]{1,0:T(1,128)}', space=vmem, size = 0x12000, scoped, tag = 'internal scratch']
  %s0 = inlined_call_operand.hbm [shape: f32[15], index: 0, kind: input, shape index: {}]
  %s1 = inlined_call_operand.hbm [shape: f32[4,128], index: 1, kind: input, shape index: {}]
  %s2 = inlined_call_operand.hbm [shape: f32[1,128], index: 2, kind: output, shape index: {}]
  %s3 = sld [smem:[#allocation0]]
  $region26: #{tpu_custom_call.1} parent=0
    _
  %s5 = ssub.s32 1, %s3
  %s6 = scalar_select 0, %s5, %s3
  $region1: #{tpu_custom_call.1} parent=0
    #allocation2 [shape = 'u8[512]{0}', space=smem, size = 0x200, scoped, tag = 'input window, operand 0, single buffered']
    #allocation3 [shape = 's32[1]{0}', space=sflag, size = 0x4, scoped, tag = 'scoped memory for tpu_custom_call.1']
    #allocation4 [shape = 's32[1]{0}', space=sflag, size = 0x4, scoped, tag = 'scoped memory for tpu_custom_call.1']
    #allocation5 [shape = 's32[1]{0}', space=sflag, size = 0x4, scoped, tag = 'scoped memory for tpu_custom_call.1']
    #allocation6 [shape = 'u8[2048]{0}', space=vmem, size = 0x800, scoped, tag = 'input window, operand 1, single buffered']
    #allocation7 [shape = 'u8[512]{0}', space=vmem, size = 0x400, scoped, tag = 'output window, operand 0, single buffered']
    %7 = vsyncpa [#allocation5], 0
    %8 = vsyncpa [#allocation3], 0
    %9 = vsyncpa [#allocation4], 0
    // Predicated region
    $region2: #{tpu_custom_call.1} parent=1 // pred_check
      _
    $region3: #{tpu_custom_call.1} parent=1 // pred_check_branch
      %11 = sbr.rel (0) target = $region5
    $region4: #{tpu_custom_call.1} parent=1 // pred_region
      %s13 = ssub.s32 16, 16
      %14 = vsyncadd [#allocation5], %s13
      %17 = dma.hbm_to_smem %s0, 16, [#allocation2], [#allocation5]
    $region5: #{tpu_custom_call.1} parent=1 // pred_fallthru
      _
    // Predicated region
    $region6: #{tpu_custom_call.1} parent=1 // pred_check
      _
    $region7: #{tpu_custom_call.1} parent=1 // pred_check_branch
      %19 = sbr.rel (0) target = $region9
    $region8: #{tpu_custom_call.1} parent=1 // pred_region
      %s21 = ssub.s32 64, 64
      %22 = vsyncadd [#allocation3], %s21
      %s24 = sshll.u32 [#allocation6], 4
      %s25 = int_to_ptr.vmem [resolvable:$true] %s24
      %27 = dma.hbm_to_vmem [thread:$0]  %s1, 64, %s25, [#allocation3]
    $region9: #{tpu_custom_call.1} parent=1 // pred_fallthru
      _
    // Predicated region
    $region10: #{tpu_custom_call.1} parent=1 // pred_check
      _
    $region11: #{tpu_custom_call.1} parent=1 // pred_check_branch
      %29 = sbr.rel (0) target = $region13
    $region12: #{tpu_custom_call.1} parent=1 // pred_region
      %30 = dma.done [#allocation5], 16
    $region13: #{tpu_custom_call.1} parent=1 // pred_fallthru
      _
    // Predicated region
    $region14: #{tpu_custom_call.1} parent=1 // pred_check
      _
    $region15: #{tpu_custom_call.1} parent=1 // pred_check_branch
      %32 = sbr.rel (0) target = $region17
    $region16: #{tpu_custom_call.1} parent=1 // pred_region
      %33 = dma.done [#allocation3], 64
    $region17: #{tpu_custom_call.1} parent=1 // pred_fallthru
      _
    %34 = sfence
    %v35 = vld [vmem:[#allocation6] sm:$0xf]
    %s36 = sld [smem:[#allocation2]]
    %v37 = vstv %s36
    %s38 = sld [smem:[#allocation2 + $0x1]]
    %v39 = vstv %s38
    %v40 = vmul.f32 %v39, %v35
    %v41 = vadd.f32 %v37, %v40
    %s42 = sld [smem:[#allocation2 + $0x2]]
    %v43 = vstv %s42
    %v44 = vmul.f32 %v43, %v35
    %v46 = vrot.slane %v44, 1
    %v48 = vadd.f32 %v41, %v46
    %s49 = sld [smem:[#allocation2 + $0x3]]
    %v50 = vstv %s49
    %v51 = vmul.f32 %v50, %v35
    %v53 = vrot.slane %v51, 2
    %v55 = vadd.f32 %v48, %v53
    %s56 = sld [smem:[#allocation2 + $0x4]]
    %v57 = vstv %s56
    %v58 = vmul.f32 %v57, %v35
    %v60 = vrot.slane %v58, 3
    %v62 = vadd.f32 %v55, %v60
    %s63 = sld [smem:[#allocation2 + $0x5]]
    %v64 = vmul.f32 %v35, %v35
    %v65 = vstv %s63
    %v66 = vmul.f32 %v65, %v64
    %v67 = vadd.f32 %v62, %v66
    %s68 = sld [smem:[#allocation2 + $0x6]]
    %v70 = vrot.slane %v35, 1
    %v72 = vmul.f32 %v35, %v70
    %v73 = vstv %s68
    %v74 = vmul.f32 %v73, %v72
    %v75 = vadd.f32 %v67, %v74
    %s76 = sld [smem:[#allocation2 + $0x7]]
    %v77 = vrot.slane %v35, 2
    %v79 = vmul.f32 %v35, %v77
    %v80 = vstv %s76
    %v81 = vmul.f32 %v80, %v79
    %v82 = vadd.f32 %v75, %v81
    %s83 = sld [smem:[#allocation2 + $0x8]]
    %v84 = vrot.slane %v35, 3
    %v86 = vmul.f32 %v35, %v84
    %v87 = vstv %s83
    %v88 = vmul.f32 %v87, %v86
    %v89 = vadd.f32 %v82, %v88
    %s90 = sld [smem:[#allocation2 + $0x9]]
    %v91 = vstv %s90
    %v92 = vmul.f32 %v91, %v64
    %v94 = vrot.slane %v92, 1
    %v96 = vadd.f32 %v89, %v94
    %s97 = sld [smem:[#allocation2 + $0xa]]
    %v98 = vstv %s97
    %v99 = vmul.f32 %v98, %v72
    %v101 = vrot.slane %v99, 1
    %v103 = vadd.f32 %v96, %v101
    %s104 = sld [smem:[#allocation2 + $0xb]]
    %v105 = vstv %s104
    %v106 = vmul.f32 %v105, %v79
    %v108 = vrot.slane %v106, 1
    %v110 = vadd.f32 %v103, %v108
    %s111 = sld [smem:[#allocation2 + $0xc]]
    %v112 = vstv %s111
    %v113 = vmul.f32 %v112, %v64
    %v115 = vrot.slane %v113, 2
    %v117 = vadd.f32 %v110, %v115
    %s118 = sld [smem:[#allocation2 + $0xd]]
    %v119 = vstv %s118
    %v120 = vmul.f32 %v119, %v72
    %v122 = vrot.slane %v120, 2
    %v124 = vadd.f32 %v117, %v122
    %s125 = sld [smem:[#allocation2 + $0xe]]
    %v126 = vstv %s125
    %v127 = vmul.f32 %v126, %v64
    %v129 = vrot.slane %v127, 3
    %v131 = vadd.f32 %v124, %v129
    %132 = vst [vmem:[#allocation7] sm:$0x1] %v131
    // Predicated region
    $region18: #{tpu_custom_call.1} parent=1 // pred_check
      _
    $region19: #{tpu_custom_call.1} parent=1 // pred_check_branch
      %134 = sbr.rel (0) target = $region21
    $region20: #{tpu_custom_call.1} parent=1 // pred_region
      %s136 = ssub.s32 16, 16
      %137 = vsyncadd [#allocation4], %s136
      %s139 = sshll.u32 [#allocation7], 4
      %s140 = int_to_ptr.vmem [resolvable:$true] %s139
      %142 = dma.vmem_to_hbm [thread:$0]  %s140, 16, %s2, [#allocation4]
    $region21: #{tpu_custom_call.1} parent=1 // pred_fallthru
      _
    // Predicated region
    $region22: #{tpu_custom_call.1} parent=1 // pred_check
      _
    $region23: #{tpu_custom_call.1} parent=1 // pred_check_branch
      %144 = sbr.rel (0) target = $region25
    $region24: #{tpu_custom_call.1} parent=1 // pred_region
      %145 = dma.done [#allocation4], 16
    $region25: #{tpu_custom_call.1} parent=1 // pred_fallthru
      _
    %146 = vsyncpa [#allocation3], 1
    %147 = vsyncpa [#allocation4], 1
    %148 = vsyncpa [#allocation5], 1

</llo_original>
